<compile_context>
chip_gen: v6e
topology: v6e:2x2x1
jax: 0.10.0
libtpu: 0.0.40
codegen_flags: <defaults>
</compile_context>

<pallas_src>
import jax
import jax.numpy as jnp
import numpy as np
from jax.experimental import pallas as pl
from jax.experimental.pallas import tpu as pltpu


def _round_up(x, m):
    return ((x + m - 1) // m) * m


# ---------------------------------------------------------------------------
# Pallas kernel: whole 4-layer MLP fused; weights resident, batch tiled by grid.
# ---------------------------------------------------------------------------
def mlp_fused_kernel(x_ref, w1_ref, w_ref, b_ref, out_ref):
    # x_ref  : (TILE_B, P_in)   bf16  -- padded, flattened inputs
    # w1_ref : (P_in, P_f)      bf16  -- padded W1 (in_features, out_features)
    # w_ref  : (3, P_f, P_f)    bf16  -- padded W2..W4
    # b_ref  : (4, P_f)         f32   -- padded b1..b4
    # out_ref: (TILE_B, P_f)    f32   -- padded hidden_actor
    h = x_ref[...]                                           # bf16 MXU operand
    z = jnp.dot(h, w1_ref[...],
                preferred_element_type=jnp.float32) + b_ref[pl.ds(0, 1), :]
    a = jnp.tanh(z)                                          # f32, EUP
    h = a.astype(jnp.bfloat16)
    for layer in range(3):                                   # static unroll
        w = w_ref[layer]                                     # (P_f, P_f) bf16
        b = b_ref[pl.ds(layer + 1, 1), :]                    # (1, P_f) f32
        z = jnp.dot(h, w, preferred_element_type=jnp.float32) + b
        a = jnp.tanh(z)
        h = a.astype(jnp.bfloat16)
    out_ref[...] = a                                          # lane-dense f32 store


# ---------------------------------------------------------------------------
# Wrapper: pad/flatten, launch the kernel, slice back, pass rnn_hxs through.
# ---------------------------------------------------------------------------
def mlp_base_forward(inputs, rnn_hxs, masks, w1_slab, w_slab, b_slab, hidden_size):
    """recurrent=False path: masks unused, rnn_hxs returned unchanged."""
    del masks  # non-recurrent path
    B = inputs.shape[0]
    P_in = w1_slab.shape[0]
    P_f = w1_slab.shape[1]

    # Flatten (B, num_inputs, poly_n_codes) -> (B, d_in); contiguous no-op.
    x = inputs.reshape(B, -1)
    d_in = x.shape[1]

    TILE_B = min(256, _round_up(B, 8))
    B_pad = _round_up(B, TILE_B)

    # Pad batch + features; cast activations to bf16 (halves input DMA bytes).
    x_p = jnp.pad(x.astype(jnp.bfloat16), ((0, B_pad - B), (0, P_in - d_in)))

    grid = (B_pad // TILE_B,)
    cost = pl.CostEstimate(
        flops=2 * B_pad * (P_in * P_f + 3 * P_f * P_f),
        transcendentals=B_pad * 4 * P_f,
        bytes_accessed=(x_p.size * 2 + w1_slab.size * 2 + w_slab.size * 2
                        + b_slab.size * 4 + B_pad * P_f * 4),
    )

    out_padded = pl.pallas_call(
        mlp_fused_kernel,
        out_shape=jax.ShapeDtypeStruct((B_pad, P_f), jnp.float32),
        grid=grid,
        in_specs=[
            pl.BlockSpec((TILE_B, P_in), lambda i: (i, 0)),    # x tile, streamed
            pl.BlockSpec((P_in, P_f), lambda i: (0, 0)),       # W1, resident
            pl.BlockSpec((3, P_f, P_f), lambda i: (0, 0, 0)),  # W2..W4, resident
            pl.BlockSpec((4, P_f), lambda i: (0, 0)),          # biases, resident
        ],
        out_specs=pl.BlockSpec((TILE_B, P_f), lambda i: (i, 0)),
        compiler_params=pltpu.CompilerParams(
            dimension_semantics=("parallel",)),                # megacore sharding
        cost_estimate=cost,
    )(x_p, w1_slab, w_slab, b_slab)

    hidden_actor = out_padded[:B, :hidden_size]
    # TODO(synk): GRU path (_forward_gru) not implemented; module is built with recurrent=False.
    return hidden_actor, rnn_hxs


# ---------------------------------------------------------------------------
# Deterministic parameter init (orthogonal * sqrt(2), zero bias) — synthetic.
# ---------------------------------------------------------------------------
def orthogonal_init(key, out_features, in_features, gain):
    n = max(out_features, in_features)
    a = jax.random.normal(key, (n, n), jnp.float32)
    q, r = jnp.linalg.qr(a)
    q = q * jnp.sign(jnp.diag(r))          # deterministic sign convention
    w = q[:out_features, :in_features]     # PyTorch stores (out, in)
    return gain * w


def make_params(key, num_inputs, poly_n_codes, hidden_size):
    gain = np.sqrt(2.0)
    d_in = num_inputs * poly_n_codes
    keys = jax.random.split(key, 4)
    # encoder
    w1 = orthogonal_init(keys[0], hidden_size, d_in, gain).T          # (d_in, hidden)
    b1 = jnp.zeros((1, hidden_size), jnp.float32)
    w2 = orthogonal_init(keys[1], num_inputs, hidden_size, gain).T    # (hidden, num_inputs)
    b2 = jnp.zeros((1, num_inputs), jnp.float32)
    # hidden_actor
    w3 = orthogonal_init(keys[2], hidden_size, num_inputs, gain).T    # (num_inputs, hidden)
    b3 = jnp.zeros((1, hidden_size), jnp.float32)
    w4 = orthogonal_init(keys[3], hidden_size, hidden_size, gain).T   # (hidden, hidden)
    b4 = jnp.zeros((1, hidden_size), jnp.float32)
    return (w1, b1, w2, b2, w3, b3, w4, b4)


def pack_params(params, p_in, p_f):
    """Pack W1 into a (P_in,P_f) bf16 slab, W2..W4 into (3,P_f,P_f), b1..b4 into (4,P_f)."""
    w1, b1, w2, b2, w3, b3, w4, b4 = params

    def pad_w(w, rows, cols):
        return jnp.pad(w, ((0, rows - w.shape[0]), (0, cols - w.shape[1])))

    def pad_b(b):
        b = b.reshape(-1)
        return jnp.pad(b, (0, p_f - b.shape[0]))

    w1_slab = pad_w(w1, p_in, p_f).astype(jnp.bfloat16)
    w_slab = jnp.stack([pad_w(w, p_f, p_f) for w in (w2, w3, w4)]).astype(jnp.bfloat16)
    b_slab = jnp.stack([pad_b(b) for b in (b1, b2, b3, b4)]).astype(jnp.float32)
    return w1_slab, w_slab, b_slab


# ---------------------------------------------------------------------------
# Pure-JAX references for correctness checks.
# ---------------------------------------------------------------------------
def reference_forward_f32(inputs, rnn_hxs, params):
    w1, b1, w2, b2, w3, b3, w4, b4 = params
    h = inputs.reshape(inputs.shape[0], -1)
    for w, b in ((w1, b1), (w2, b2), (w3, b3), (w4, b4)):
        h = jnp.tanh(h @ w + b)
    return h, rnn_hxs


def reference_forward_bf16(inputs, rnn_hxs, params):
    """Matches the kernel's numerics: bf16 MXU operands, f32 accumulate/bias/tanh."""
    w1, b1, w2, b2, w3, b3, w4, b4 = params
    h = inputs.reshape(inputs.shape[0], -1).astype(jnp.bfloat16)
    a = None
    for w, b in ((w1, b1), (w2, b2), (w3, b3), (w4, b4)):
        z = jnp.dot(h, w.astype(jnp.bfloat16),
                    preferred_element_type=jnp.float32) + b
        a = jnp.tanh(z)
        h = a.astype(jnp.bfloat16)
    return a, rnn_hxs


if __name__ == "__main__":
    # Small shapes consistent with the module's forward.
    batch = 8
    num_inputs = 32
    poly_n_codes = 4
    hidden_size = 64

    key = jax.random.PRNGKey(0)
    k_in, k_hx, k_p = jax.random.split(key, 3)

    inputs = jax.random.normal(k_in, (batch, num_inputs, poly_n_codes), jnp.float32)
    rnn_hxs = jax.random.normal(k_hx, (batch, 1), jnp.float32)  # recurrent_hidden_state_size == 1
    masks = jnp.ones((batch, 1), jnp.float32)

    params = make_params(k_p, num_inputs, poly_n_codes, hidden_size)

    # Pad the flattened-input dim and the feature dims to lane-dense multiples of 128.
    d_in = num_inputs * poly_n_codes
    P_in = _round_up(d_in, 128)
    P_f = _round_up(max(hidden_size, num_inputs), 128)
    w1_slab, w_slab, b_slab = pack_params(params, P_in, P_f)

    hidden_actor, rnn_hxs_out = mlp_base_forward(
        inputs, rnn_hxs, masks, w1_slab, w_slab, b_slab, hidden_size)
    jax.block_until_ready(hidden_actor)
    jax.block_until_ready(rnn_hxs_out)

    assert hidden_actor.shape == (batch, hidden_size)
    assert rnn_hxs_out.shape == rnn_hxs.shape

    # Primary check: against a reference with identical bf16-operand numerics.
    ref_bf16, ref_hxs = reference_forward_bf16(inputs, rnn_hxs, params)
    np.testing.assert_allclose(np.asarray(hidden_actor), np.asarray(ref_bf16),
                               rtol=5e-3, atol=5e-3)
    # Sanity check: close to the full-f32 PyTorch-equivalent math.
    ref_f32, _ = reference_forward_f32(inputs, rnn_hxs, params)
    np.testing.assert_allclose(np.asarray(hidden_actor), np.asarray(ref_f32),
                               rtol=5e-2, atol=5e-2)
    np.testing.assert_allclose(np.asarray(rnn_hxs_out), np.asarray(ref_hxs),
                               rtol=0, atol=0)

    print("KERNEL_OK")
</pallas_src>

<mosaic_0001>
module attributes {stable_mosaic.version = 11 : i64} {
  func.func @mlp_fused_kernel(%arg0: i32, %arg1: memref<8x128xbf16, #tpu.memory_space<vmem>>, %arg2: memref<128x128xbf16, #tpu.memory_space<vmem>>, %arg3: memref<3x128x128xbf16, #tpu.memory_space<vmem>>, %arg4: memref<4x128xf32, #tpu.memory_space<vmem>>, %arg5: memref<8x128xf32, #tpu.memory_space<vmem>>) attributes {dimension_semantics = [#tpu.dimension_semantics<parallel>], iteration_bounds = array<i64: 1>, scalar_prefetch = 0 : i64, scratch_operands = 0 : i64, tpu.core_type = #tpu.core_type<tc>, window_params = [{transform_indices = @transform_0, window_bounds = array<i64: 8, 128>}, {pipeline_mode = #tpu.pipeline_mode<synchronous>, transform_indices = @transform_1, window_bounds = array<i64: 128, 128>}, {pipeline_mode = #tpu.pipeline_mode<synchronous>, transform_indices = @transform_2, window_bounds = array<i64: 3, 128, 128>}, {pipeline_mode = #tpu.pipeline_mode<synchronous>, transform_indices = @transform_3, window_bounds = array<i64: 4, 128>}, {transform_indices = @transform_4, window_bounds = array<i64: 8, 128>}]} {
    %c0 = arith.constant 0 : index
    %c0_0 = arith.constant 0 : index
    %0 = vector.load %arg1[%c0, %c0_0] : memref<8x128xbf16, #tpu.memory_space<vmem>>, vector<8x128xbf16>
    %c0_1 = arith.constant 0 : index
    %c0_2 = arith.constant 0 : index
    %1 = vector.load %arg2[%c0_1, %c0_2] : memref<128x128xbf16, #tpu.memory_space<vmem>>, vector<128x128xbf16>
    %cst = arith.constant dense<0.000000e+00> : vector<8x128xf32>
    %2 = tpu.matmul %0, %1, %cst {dimension_numbers = #tpu.dot_dimension_numbers<[1], [0], [0], [1], [0, 0, 1, 1], [], []>} : vector<8x128xbf16>, vector<128x128xbf16>, vector<8x128xf32> -> vector<8x128xf32>
    %c0_3 = arith.constant 0 : index
    %c0_4 = arith.constant 0 : index
    %3 = vector.load %arg4[%c0_3, %c0_4] : memref<4x128xf32, #tpu.memory_space<vmem>>, vector<1x128xf32>
    %4 = vector.broadcast %3 : vector<1x128xf32> to vector<8x128xf32>
    %5 = arith.addf %2, %4 : vector<8x128xf32>
    %6 = math.tanh %5 : vector<8x128xf32>
    %7 = arith.truncf %6 : vector<8x128xf32> to vector<8x128xbf16>
    %c0_5 = arith.constant 0 : index
    %c0_6 = arith.constant 0 : index
    %c0_7 = arith.constant 0 : index
    %8 = vector.load %arg3[%c0_5, %c0_6, %c0_7] : memref<3x128x128xbf16, #tpu.memory_space<vmem>>, vector<1x128x128xbf16>
    %9 = vector.shape_cast %8 : vector<1x128x128xbf16> to vector<128x128xbf16>
    %c1 = arith.constant 1 : index
    %c0_8 = arith.constant 0 : index
    %10 = vector.load %arg4[%c1, %c0_8] : memref<4x128xf32, #tpu.memory_space<vmem>>, vector<1x128xf32>
    %cst_9 = arith.constant dense<0.000000e+00> : vector<8x128xf32>
    %11 = tpu.matmul %7, %9, %cst_9 {dimension_numbers = #tpu.dot_dimension_numbers<[1], [0], [0], [1], [0, 0, 1, 1], [], []>} : vector<8x128xbf16>, vector<128x128xbf16>, vector<8x128xf32> -> vector<8x128xf32>
    %12 = vector.broadcast %10 : vector<1x128xf32> to vector<8x128xf32>
    %13 = arith.addf %11, %12 : vector<8x128xf32>
    %14 = math.tanh %13 : vector<8x128xf32>
    %15 = arith.truncf %14 : vector<8x128xf32> to vector<8x128xbf16>
    %c1_10 = arith.constant 1 : index
    %c0_11 = arith.constant 0 : index
    %c0_12 = arith.constant 0 : index
    %16 = vector.load %arg3[%c1_10, %c0_11, %c0_12] : memref<3x128x128xbf16, #tpu.memory_space<vmem>>, vector<1x128x128xbf16>
    %17 = vector.shape_cast %16 : vector<1x128x128xbf16> to vector<128x128xbf16>
    %c2 = arith.constant 2 : index
    %c0_13 = arith.constant 0 : index
    %18 = vector.load %arg4[%c2, %c0_13] : memref<4x128xf32, #tpu.memory_space<vmem>>, vector<1x128xf32>
    %cst_14 = arith.constant dense<0.000000e+00> : vector<8x128xf32>
    %19 = tpu.matmul %15, %17, %cst_14 {dimension_numbers = #tpu.dot_dimension_numbers<[1], [0], [0], [1], [0, 0, 1, 1], [], []>} : vector<8x128xbf16>, vector<128x128xbf16>, vector<8x128xf32> -> vector<8x128xf32>
    %20 = vector.broadcast %18 : vector<1x128xf32> to vector<8x128xf32>
    %21 = arith.addf %19, %20 : vector<8x128xf32>
    %22 = math.tanh %21 : vector<8x128xf32>
    %23 = arith.truncf %22 : vector<8x128xf32> to vector<8x128xbf16>
    %c2_15 = arith.constant 2 : index
    %c0_16 = arith.constant 0 : index
    %c0_17 = arith.constant 0 : index
    %24 = vector.load %arg3[%c2_15, %c0_16, %c0_17] : memref<3x128x128xbf16, #tpu.memory_space<vmem>>, vector<1x128x128xbf16>
    %25 = vector.shape_cast %24 : vector<1x128x128xbf16> to vector<128x128xbf16>
    %c3 = arith.constant 3 : index
    %c0_18 = arith.constant 0 : index
    %26 = vector.load %arg4[%c3, %c0_18] : memref<4x128xf32, #tpu.memory_space<vmem>>, vector<1x128xf32>
    %cst_19 = arith.constant dense<0.000000e+00> : vector<8x128xf32>
    %27 = tpu.matmul %23, %25, %cst_19 {dimension_numbers = #tpu.dot_dimension_numbers<[1], [0], [0], [1], [0, 0, 1, 1], [], []>} : vector<8x128xbf16>, vector<128x128xbf16>, vector<8x128xf32> -> vector<8x128xf32>
    %28 = vector.broadcast %26 : vector<1x128xf32> to vector<8x128xf32>
    %29 = arith.addf %27, %28 : vector<8x128xf32>
    %30 = math.tanh %29 : vector<8x128xf32>
    %c0_20 = arith.constant 0 : index
    %c0_21 = arith.constant 0 : index
    %31 = vector.load %arg5[%c0_20, %c0_21] : memref<8x128xf32, #tpu.memory_space<vmem>>, vector<8x128xf32>
    tpu.vector_store %arg5[%c0_20, %c0_21], %30 {strides = array<i32>} : memref<8x128xf32, #tpu.memory_space<vmem>>, vector<8x128xf32>,
    return
  }
  func.func @transform_0(%arg0: i32) -> (i32, i32) {
    %c0_i32 = arith.constant 0 : i32
    %c0_i32_0 = arith.constant 0 : i32
    return %arg0, %c0_i32 : i32, i32
  }
  func.func @transform_1(%arg0: i32) -> (i32, i32) {
    %c0_i32 = arith.constant 0 : i32
    %c0_i32_0 = arith.constant 0 : i32
    %c0_i32_1 = arith.constant 0 : i32
    return %c0_i32, %c0_i32_0 : i32, i32
  }
  func.func @transform_2(%arg0: i32) -> (i32, i32, i32) {
    %c0_i32 = arith.constant 0 : i32
    %c0_i32_0 = arith.constant 0 : i32
    %c0_i32_1 = arith.constant 0 : i32
    %c0_i32_2 = arith.constant 0 : i32
    return %c0_i32, %c0_i32_0, %c0_i32_1 : i32, i32, i32
  }
  func.func @transform_3(%arg0: i32) -> (i32, i32) {
    %c0_i32 = arith.constant 0 : i32
    %c0_i32_0 = arith.constant 0 : i32
    %c0_i32_1 = arith.constant 0 : i32
    return %c0_i32, %c0_i32_0 : i32, i32
  }
  func.func @transform_4(%arg0: i32) -> (i32, i32) {
    %c0_i32 = arith.constant 0 : i32
    %c0_i32_0 = arith.constant 0 : i32
    return %arg0, %c0_i32 : i32, i32
  }
}

</mosaic_0001>

<llo_original>
// kernel: tpu_custom_call.1
$region0: #{tpu_custom_call.1}
  #allocation0 [shape = 'u32[]', space=smem, size = 0x4, offset = 0x4, fixed_abs, tag = 'smem constant byte address 0x4 - core index']
  #allocation1 [shape = 'u32[144,128]{1,0:T(1,128)}', space=vmem, size = 0x12000, scoped, tag = 'internal scratch']
  %s0 = inlined_call_operand.hbm [shape: bf16[8,128], index: 0, kind: input, shape index: {}]
  %s1 = inlined_call_operand.hbm [shape: bf16[128,128], index: 1, kind: input, shape index: {}]
  %s2 = inlined_call_operand.hbm [shape: bf16[3,128,128], index: 2, kind: input, shape index: {}]
  %s3 = inlined_call_operand.vmem [shape: f32[4,128], index: 3, kind: input, shape index: {}]
  %s4 = inlined_call_operand.hbm [shape: f32[8,128], index: 4, kind: output, shape index: {}]
  %s5 = sld [smem:[#allocation0]]
  $region38: #{tpu_custom_call.1} parent=0
    _
  %s7 = ssub.s32 1, %s5
  %s8 = scalar_select 0, %s7, %s5
  $region1: #{tpu_custom_call.1} parent=0
    #allocation2 [shape = 'u8[2048]{0}', space=vmem, size = 0x800, scoped, tag = 'input window, operand 0, single buffered']
    #allocation3 [shape = 's32[1]{0}', space=sflag, size = 0x4, scoped, tag = 'scoped memory for tpu_custom_call.1']
    #allocation4 [shape = 's32[1]{0}', space=sflag, size = 0x4, scoped, tag = 'scoped memory for tpu_custom_call.1']
    #allocation5 [shape = 'u8[32768]{0}', space=vmem, size = 0x8000, scoped, tag = 'input window, operand 1, single buffered']
    #allocation6 [shape = 's32[1]{0}', space=sflag, size = 0x4, scoped, tag = 'scoped memory for tpu_custom_call.1']
    #allocation7 [shape = 'u8[98304]{0}', space=vmem, size = 0x18000, scoped, tag = 'input window, operand 2, single buffered']
    #allocation8 [shape = 'u8[4096]{0}', space=vmem, size = 0x1000, scoped, tag = 'output window, operand 0, single buffered']
    %9 = vsyncpa [#allocation3], 0
    %10 = vsyncpa [#allocation6], 0
    %11 = vsyncpa [#allocation4], 0
    // Predicated region
    $region2: #{tpu_custom_call.1} parent=1 // pred_check
      _
    $region3: #{tpu_custom_call.1} parent=1 // pred_check_branch
      %13 = sbr.rel (0) target = $region5
    $region4: #{tpu_custom_call.1} parent=1 // pred_region
      %s15 = ssub.s32 64, 64
      %16 = vsyncadd [#allocation3], %s15
      %s18 = sshll.u32 [#allocation2], 4
      %s19 = int_to_ptr.vmem [resolvable:$true] %s18
      %21 = dma.hbm_to_vmem [thread:$0]  %s0, 64, %s19, [#allocation3]
    $region5: #{tpu_custom_call.1} parent=1 // pred_fallthru
      _
    // Predicated region
    $region6: #{tpu_custom_call.1} parent=1 // pred_check
      _
    $region7: #{tpu_custom_call.1} parent=1 // pred_check_branch
      %23 = sbr.rel (0) target = $region9
    $region8: #{tpu_custom_call.1} parent=1 // pred_region
      %s25 = ssub.s32 1024, 1024
      %26 = vsyncadd [#allocation6], %s25
      %s27 = sshll.u32 [#allocation5], 4
      %s28 = int_to_ptr.vmem [resolvable:$true] %s27
      %33 = dma.hbm_to_vmem [thread:$0]  %s1, 1024, %s28, [#allocation6], 64, 64, 4
    $region9: #{tpu_custom_call.1} parent=1 // pred_fallthru
      _
    // Predicated region
    $region10: #{tpu_custom_call.1} parent=1 // pred_check
      _
    $region11: #{tpu_custom_call.1} parent=1 // pred_check_branch
      %35 = sbr.rel (0) target = $region13
    $region12: #{tpu_custom_call.1} parent=1 // pred_region
      %s37 = ssub.s32 3072, 3072
      %38 = vsyncadd [#allocation6], %s37
      %s39 = sshll.u32 [#allocation7], 4
      %s40 = int_to_ptr.vmem [resolvable:$true] %s39
      %45 = dma.hbm_to_vmem [thread:$0]  %s2, 3072, %s40, [#allocation6], 64, 64, 4
    $region13: #{tpu_custom_call.1} parent=1 // pred_fallthru
      _
    // Predicated region
    $region14: #{tpu_custom_call.1} parent=1 // pred_check
      _
    $region15: #{tpu_custom_call.1} parent=1 // pred_check_branch
      %47 = sbr.rel (0) target = $region17
    $region16: #{tpu_custom_call.1} parent=1 // pred_region
      _
    $region17: #{tpu_custom_call.1} parent=1 // pred_fallthru
      _
    // Predicated region
    $region18: #{tpu_custom_call.1} parent=1 // pred_check
      _
    $region19: #{tpu_custom_call.1} parent=1 // pred_check_branch
      %49 = sbr.rel (0) target = $region21
    $region20: #{tpu_custom_call.1} parent=1 // pred_region
      %50 = dma.done [#allocation3], 64
    $region21: #{tpu_custom_call.1} parent=1 // pred_fallthru
      _
    // Predicated region
    $region22: #{tpu_custom_call.1} parent=1 // pred_check
      _
    $region23: #{tpu_custom_call.1} parent=1 // pred_check_branch
      %52 = sbr.rel (0) target = $region25
    $region24: #{tpu_custom_call.1} parent=1 // pred_region
      %53 = dma.done [#allocation6], 1024
    $region25: #{tpu_custom_call.1} parent=1 // pred_fallthru
      _
    // Predicated region
    $region26: #{tpu_custom_call.1} parent=1 // pred_check
      _
    $region27: #{tpu_custom_call.1} parent=1 // pred_check_branch
      %55 = sbr.rel (0) target = $region29
    $region28: #{tpu_custom_call.1} parent=1 // pred_region
      %56 = dma.done [#allocation6], 3072
    $region29: #{tpu_custom_call.1} parent=1 // pred_fallthru
      _
    %v58 = vld [vmem:[#allocation2] sm:$0xf]
    %v59 = vld [vmem:[#allocation5] sm:$0xf]
    %v60 = vld [vmem:[#allocation5 + $0x4] sm:$0xf]
    %v61 = vld [vmem:[#allocation5 + $0x8] sm:$0xf]
    %v62 = vld [vmem:[#allocation5 + $0xc] sm:$0xf]
    %v63 = vld [vmem:[#allocation5 + $0x10] sm:$0xf]
    %v64 = vld [vmem:[#allocation5 + $0x14] sm:$0xf]
    %v65 = vld [vmem:[#allocation5 + $0x18] sm:$0xf]
    %v66 = vld [vmem:[#allocation5 + $0x1c] sm:$0xf]
    %v67 = vld [vmem:[#allocation5 + $0x20] sm:$0xf]
    %v68 = vld [vmem:[#allocation5 + $0x24] sm:$0xf]
    %v69 = vld [vmem:[#allocation5 + $0x28] sm:$0xf]
    %v70 = vld [vmem:[#allocation5 + $0x2c] sm:$0xf]
    %v71 = vld [vmem:[#allocation5 + $0x30] sm:$0xf]
    %v72 = vld [vmem:[#allocation5 + $0x34] sm:$0xf]
    %v73 = vld [vmem:[#allocation5 + $0x38] sm:$0xf]
    %v74 = vld [vmem:[#allocation5 + $0x3c] sm:$0xf]
    %v75 = vld [vmem:[%s3] sm:$0x1]
    %v76 = vlaneseq
    %v77 = vshrl.u32 %v76, 7
    %v78 = vsub.s32 0, %v77
    %v79 = vrot.slane %v75, %v78
    %v96 = vunpack.c.l.b16 %v59
    %v97 = vunpack.c.l.b16 %v60
    %v98 = vunpack.c.l.b16 %v61
    %v99 = vunpack.c.l.b16 %v62
    %v100 = vunpack.c.l.b16 %v63
    %v101 = vunpack.c.l.b16 %v64
    %v102 = vunpack.c.l.b16 %v65
    %v103 = vunpack.c.l.b16 %v66
    %v104 = vunpack.c.l.b16 %v67
    %v105 = vunpack.c.l.b16 %v68
    %v106 = vunpack.c.l.b16 %v69
    %v107 = vunpack.c.l.b16 %v70
    %v108 = vunpack.c.l.b16 %v71
    %v109 = vunpack.c.l.b16 %v72
    %v110 = vunpack.c.l.b16 %v73
    %v111 = vunpack.c.l.b16 %v74
    %v112 = vpack.c.b16 %v97, %v96
    %v113 = vpack.c.b16 %v99, %v98
    %v114 = vpack.c.b16 %v101, %v100
    %v115 = vpack.c.b16 %v103, %v102
    %v116 = vpack.c.b16 %v105, %v104
    %v117 = vpack.c.b16 %v107, %v106
    %v118 = vpack.c.b16 %v109, %v108
    %v119 = vpack.c.b16 %v111, %v110
    %128 = vmatprep.subr.bf16.mxu0 0
    %129 = vmatpush1.bf16.msra.mxu0 %v119
    %130 = vmatprep.subr.bf16.mxu0 0
    %131 = vmatpush1.bf16.msra.mxu0 %v118
    %132 = vmatprep.subr.bf16.mxu0 0
    %133 = vmatpush1.bf16.msra.mxu0 %v117
    %134 = vmatprep.subr.bf16.mxu0 0
    %135 = vmatpush1.bf16.msra.mxu0 %v116
    %136 = vmatprep.subr.bf16.mxu0 0
    %137 = vmatpush1.bf16.msra.mxu0 %v115
    %138 = vmatprep.subr.bf16.mxu0 0
    %139 = vmatpush1.bf16.msra.mxu0 %v114
    %140 = vmatprep.subr.bf16.mxu0 0
    %141 = vmatpush1.bf16.msra.mxu0 %v113
    %142 = vmatprep.subr.bf16.mxu0 0
    %143 = vmatpush1.bf16.msra.mxu0 %v112
    %144 = vmatprep.subr.bf16.mxu0 0
    %145 = vmatpush2.bf16.msra.mxu0 0
    %146 = vmatprep.subr.bf16.mxu0 0
    %147 = vmatpush2.bf16.msra.mxu0 0
    %148 = vmatprep.subr.bf16.mxu0 0
    %149 = vmatpush2.bf16.msra.mxu0 0
    %150 = vmatprep.subr.bf16.mxu0 0
    %151 = vmatpush2.bf16.msra.mxu0 0
    %152 = vmatprep.subr.bf16.mxu0 0
    %153 = vmatpush2.bf16.msra.mxu0 0
    %154 = vmatprep.subr.bf16.mxu0 0
    %155 = vmatpush2.bf16.msra.mxu0 0
    %156 = vmatprep.subr.bf16.mxu0 0
    %157 = vmatpush2.bf16.msra.mxu0 0
    %158 = vmatprep.subr.bf16.mxu0 0
    %159 = vmatpush2.bf16.msra.mxu0 0
    %160 = vmatprep.mubr.bf16.mxu0 0
    %161 = vmatmul.mubr.bf16.gmra.mxu0 %v58
    %v162 = vpop.f32.mrf.mxu0
    %v163 = vadd.f32 %v79, %v162
    %v164 = vpop.f32.mrf.mxu0
    %v165 = vpop.f32.mrf.mxu0
    %v166 = vpop.f32.mrf.mxu0
    %167 = vdwg.mxu0
    %v168 = vtanh.pop %v163
    %v169 = vpack.c.bf16 %v168, %v168
    %v170 = vld [vmem:[#allocation7] sm:$0xf]
    %v171 = vld [vmem:[#allocation7 + $0x4] sm:$0xf]
    %v172 = vld [vmem:[#allocation7 + $0x8] sm:$0xf]
    %v173 = vld [vmem:[#allocation7 + $0xc] sm:$0xf]
    %v174 = vld [vmem:[#allocation7 + $0x10] sm:$0xf]
    %v175 = vld [vmem:[#allocation7 + $0x14] sm:$0xf]
    %v176 = vld [vmem:[#allocation7 + $0x18] sm:$0xf]
    %v177 = vld [vmem:[#allocation7 + $0x1c] sm:$0xf]
    %v178 = vld [vmem:[#allocation7 + $0x20] sm:$0xf]
    %v179 = vld [vmem:[#allocation7 + $0x24] sm:$0xf]
    %v180 = vld [vmem:[#allocation7 + $0x28] sm:$0xf]
    %v181 = vld [vmem:[#allocation7 + $0x2c] sm:$0xf]
    %v182 = vld [vmem:[#allocation7 + $0x30] sm:$0xf]
    %v183 = vld [vmem:[#allocation7 + $0x34] sm:$0xf]
    %v184 = vld [vmem:[#allocation7 + $0x38] sm:$0xf]
    %v185 = vld [vmem:[#allocation7 + $0x3c] sm:$0xf]
    %v186 = vld [vmem:[%s3 + $0x1] sm:$0x1]
    %v187 = vlaneseq
    %v188 = vshrl.u32 %v187, 7
    %v189 = vsub.s32 0, %v188
    %v190 = vrot.slane %v186, %v189
    %v207 = vunpack.c.l.b16 %v170
    %v208 = vunpack.c.l.b16 %v171
    %v209 = vunpack.c.l.b16 %v172
    %v210 = vunpack.c.l.b16 %v173
    %v211 = vunpack.c.l.b16 %v174
    %v212 = vunpack.c.l.b16 %v175
    %v213 = vunpack.c.l.b16 %v176
    %v214 = vunpack.c.l.b16 %v177
    %v215 = vunpack.c.l.b16 %v178
    %v216 = vunpack.c.l.b16 %v179
    %v217 = vunpack.c.l.b16 %v180
    %v218 = vunpack.c.l.b16 %v181
    %v219 = vunpack.c.l.b16 %v182
    %v220 = vunpack.c.l.b16 %v183
    %v221 = vunpack.c.l.b16 %v184
    %v222 = vunpack.c.l.b16 %v185
    %v223 = vpack.c.b16 %v208, %v207
    %v224 = vpack.c.b16 %v210, %v209
    %v225 = vpack.c.b16 %v212, %v211
    %v226 = vpack.c.b16 %v214, %v213
    %v227 = vpack.c.b16 %v216, %v215
    %v228 = vpack.c.b16 %v218, %v217
    %v229 = vpack.c.b16 %v220, %v219
    %v230 = vpack.c.b16 %v222, %v221
    %239 = vmatprep.subr.bf16.mxu0 0
    %240 = vmatpush1.bf16.msra.mxu0 %v230
    %241 = vmatprep.subr.bf16.mxu0 0
    %242 = vmatpush1.bf16.msra.mxu0 %v229
    %243 = vmatprep.subr.bf16.mxu0 0
    %244 = vmatpush1.bf16.msra.mxu0 %v228
    %245 = vmatprep.subr.bf16.mxu0 0
    %246 = vmatpush1.bf16.msra.mxu0 %v227
    %247 = vmatprep.subr.bf16.mxu0 0
    %248 = vmatpush1.bf16.msra.mxu0 %v226
    %249 = vmatprep.subr.bf16.mxu0 0
    %250 = vmatpush1.bf16.msra.mxu0 %v225
    %251 = vmatprep.subr.bf16.mxu0 0
    %252 = vmatpush1.bf16.msra.mxu0 %v224
    %253 = vmatprep.subr.bf16.mxu0 0
    %254 = vmatpush1.bf16.msra.mxu0 %v223
    %255 = vmatprep.subr.bf16.mxu0 0
    %256 = vmatpush2.bf16.msra.mxu0 0
    %257 = vmatprep.subr.bf16.mxu0 0
    %258 = vmatpush2.bf16.msra.mxu0 0
    %259 = vmatprep.subr.bf16.mxu0 0
    %260 = vmatpush2.bf16.msra.mxu0 0
    %261 = vmatprep.subr.bf16.mxu0 0
    %262 = vmatpush2.bf16.msra.mxu0 0
    %263 = vmatprep.subr.bf16.mxu0 0
    %264 = vmatpush2.bf16.msra.mxu0 0
    %265 = vmatprep.subr.bf16.mxu0 0
    %266 = vmatpush2.bf16.msra.mxu0 0
    %267 = vmatprep.subr.bf16.mxu0 0
    %268 = vmatpush2.bf16.msra.mxu0 0
    %269 = vmatprep.subr.bf16.mxu0 0
    %270 = vmatpush2.bf16.msra.mxu0 0
    %271 = vmatprep.mubr.bf16.mxu0 0
    %272 = vmatmul.mubr.bf16.gmra.mxu0 %v169
    %v273 = vpop.f32.mrf.mxu0
    %v274 = vadd.f32 %v190, %v273
    %v275 = vpop.f32.mrf.mxu0
    %v276 = vpop.f32.mrf.mxu0
    %v277 = vpop.f32.mrf.mxu0
    %278 = vdwg.mxu0
    %v279 = vtanh.pop %v274
    %v280 = vpack.c.bf16 %v279, %v279
    %s281 = scalar_lea.vmem [#allocation7], 64
    %v282 = vld [vmem:[%s281] sm:$0xf]
    %v283 = vld [vmem:[%s281 + $0x4] sm:$0xf]
    %v284 = vld [vmem:[%s281 + $0x8] sm:$0xf]
    %v285 = vld [vmem:[%s281 + $0xc] sm:$0xf]
    %v286 = vld [vmem:[%s281 + $0x10] sm:$0xf]
    %v287 = vld [vmem:[%s281 + $0x14] sm:$0xf]
    %v288 = vld [vmem:[%s281 + $0x18] sm:$0xf]
    %v289 = vld [vmem:[%s281 + $0x1c] sm:$0xf]
    %v290 = vld [vmem:[%s281 + $0x20] sm:$0xf]
    %v291 = vld [vmem:[%s281 + $0x24] sm:$0xf]
    %v292 = vld [vmem:[%s281 + $0x28] sm:$0xf]
    %v293 = vld [vmem:[%s281 + $0x2c] sm:$0xf]
    %v294 = vld [vmem:[%s281 + $0x30] sm:$0xf]
    %v295 = vld [vmem:[%s281 + $0x34] sm:$0xf]
    %v296 = vld [vmem:[%s281 + $0x38] sm:$0xf]
    %v297 = vld [vmem:[%s281 + $0x3c] sm:$0xf]
    %v298 = vld [vmem:[%s3 + $0x2] sm:$0x1]
    %v299 = vlaneseq
    %v300 = vshrl.u32 %v299, 7
    %v301 = vsub.s32 0, %v300
    %v302 = vrot.slane %v298, %v301
    %v319 = vunpack.c.l.b16 %v282
    %v320 = vunpack.c.l.b16 %v283
    %v321 = vunpack.c.l.b16 %v284
    %v322 = vunpack.c.l.b16 %v285
    %v323 = vunpack.c.l.b16 %v286
    %v324 = vunpack.c.l.b16 %v287
    %v325 = vunpack.c.l.b16 %v288
    %v326 = vunpack.c.l.b16 %v289
    %v327 = vunpack.c.l.b16 %v290
    %v328 = vunpack.c.l.b16 %v291
    %v329 = vunpack.c.l.b16 %v292
    %v330 = vunpack.c.l.b16 %v293
    %v331 = vunpack.c.l.b16 %v294
    %v332 = vunpack.c.l.b16 %v295
    %v333 = vunpack.c.l.b16 %v296
    %v334 = vunpack.c.l.b16 %v297
    %v335 = vpack.c.b16 %v320, %v319
    %v336 = vpack.c.b16 %v322, %v321
    %v337 = vpack.c.b16 %v324, %v323
    %v338 = vpack.c.b16 %v326, %v325
    %v339 = vpack.c.b16 %v328, %v327
    %v340 = vpack.c.b16 %v330, %v329
    %v341 = vpack.c.b16 %v332, %v331
    %v342 = vpack.c.b16 %v334, %v333
    %351 = vmatprep.subr.bf16.mxu0 0
    %352 = vmatpush1.bf16.msra.mxu0 %v342
    %353 = vmatprep.subr.bf16.mxu0 0
    %354 = vmatpush1.bf16.msra.mxu0 %v341
    %355 = vmatprep.subr.bf16.mxu0 0
    %356 = vmatpush1.bf16.msra.mxu0 %v340
    %357 = vmatprep.subr.bf16.mxu0 0
    %358 = vmatpush1.bf16.msra.mxu0 %v339
    %359 = vmatprep.subr.bf16.mxu0 0
    %360 = vmatpush1.bf16.msra.mxu0 %v338
    %361 = vmatprep.subr.bf16.mxu0 0
    %362 = vmatpush1.bf16.msra.mxu0 %v337
    %363 = vmatprep.subr.bf16.mxu0 0
    %364 = vmatpush1.bf16.msra.mxu0 %v336
    %365 = vmatprep.subr.bf16.mxu0 0
    %366 = vmatpush1.bf16.msra.mxu0 %v335
    %367 = vmatprep.subr.bf16.mxu0 0
    %368 = vmatpush2.bf16.msra.mxu0 0
    %369 = vmatprep.subr.bf16.mxu0 0
    %370 = vmatpush2.bf16.msra.mxu0 0
    %371 = vmatprep.subr.bf16.mxu0 0
    %372 = vmatpush2.bf16.msra.mxu0 0
    %373 = vmatprep.subr.bf16.mxu0 0
    %374 = vmatpush2.bf16.msra.mxu0 0
    %375 = vmatprep.subr.bf16.mxu0 0
    %376 = vmatpush2.bf16.msra.mxu0 0
    %377 = vmatprep.subr.bf16.mxu0 0
    %378 = vmatpush2.bf16.msra.mxu0 0
    %379 = vmatprep.subr.bf16.mxu0 0
    %380 = vmatpush2.bf16.msra.mxu0 0
    %381 = vmatprep.subr.bf16.mxu0 0
    %382 = vmatpush2.bf16.msra.mxu0 0
    %383 = vmatprep.mubr.bf16.mxu0 0
    %384 = vmatmul.mubr.bf16.gmra.mxu0 %v280
    %v385 = vpop.f32.mrf.mxu0
    %v386 = vadd.f32 %v302, %v385
    %v387 = vpop.f32.mrf.mxu0
    %v388 = vpop.f32.mrf.mxu0
    %v389 = vpop.f32.mrf.mxu0
    %390 = vdwg.mxu0
    %v391 = vtanh.pop %v386
    %v392 = vpack.c.bf16 %v391, %v391
    %s393 = scalar_lea.vmem [#allocation7], 128
    %v394 = vld [vmem:[%s393] sm:$0xf]
    %v395 = vld [vmem:[%s393 + $0x4] sm:$0xf]
    %v396 = vld [vmem:[%s393 + $0x8] sm:$0xf]
    %v397 = vld [vmem:[%s393 + $0xc] sm:$0xf]
    %v398 = vld [vmem:[%s393 + $0x10] sm:$0xf]
    %v399 = vld [vmem:[%s393 + $0x14] sm:$0xf]
    %v400 = vld [vmem:[%s393 + $0x18] sm:$0xf]
    %v401 = vld [vmem:[%s393 + $0x1c] sm:$0xf]
    %v402 = vld [vmem:[%s393 + $0x20] sm:$0xf]
    %v403 = vld [vmem:[%s393 + $0x24] sm:$0xf]
    %v404 = vld [vmem:[%s393 + $0x28] sm:$0xf]
    %v405 = vld [vmem:[%s393 + $0x2c] sm:$0xf]
    %v406 = vld [vmem:[%s393 + $0x30] sm:$0xf]
    %v407 = vld [vmem:[%s393 + $0x34] sm:$0xf]
    %v408 = vld [vmem:[%s393 + $0x38] sm:$0xf]
    %v409 = vld [vmem:[%s393 + $0x3c] sm:$0xf]
    %v410 = vld [vmem:[%s3 + $0x3] sm:$0x1]
    %v411 = vlaneseq
    %v412 = vshrl.u32 %v411, 7
    %v413 = vsub.s32 0, %v412
    %v414 = vrot.slane %v410, %v413
    %v431 = vunpack.c.l.b16 %v394
    %v432 = vunpack.c.l.b16 %v395
    %v433 = vunpack.c.l.b16 %v396
    %v434 = vunpack.c.l.b16 %v397
    %v435 = vunpack.c.l.b16 %v398
    %v436 = vunpack.c.l.b16 %v399
    %v437 = vunpack.c.l.b16 %v400
    %v438 = vunpack.c.l.b16 %v401
    %v439 = vunpack.c.l.b16 %v402
    %v440 = vunpack.c.l.b16 %v403
    %v441 = vunpack.c.l.b16 %v404
    %v442 = vunpack.c.l.b16 %v405
    %v443 = vunpack.c.l.b16 %v406
    %v444 = vunpack.c.l.b16 %v407
    %v445 = vunpack.c.l.b16 %v408
    %v446 = vunpack.c.l.b16 %v409
    %v447 = vpack.c.b16 %v432, %v431
    %v448 = vpack.c.b16 %v434, %v433
    %v449 = vpack.c.b16 %v436, %v435
    %v450 = vpack.c.b16 %v438, %v437
    %v451 = vpack.c.b16 %v440, %v439
    %v452 = vpack.c.b16 %v442, %v441
    %v453 = vpack.c.b16 %v444, %v443
    %v454 = vpack.c.b16 %v446, %v445
    %463 = vmatprep.subr.bf16.mxu0 0
    %464 = vmatpush1.bf16.msra.mxu0 %v454
    %465 = vmatprep.subr.bf16.mxu0 0
    %466 = vmatpush1.bf16.msra.mxu0 %v453
    %467 = vmatprep.subr.bf16.mxu0 0
    %468 = vmatpush1.bf16.msra.mxu0 %v452
    %469 = vmatprep.subr.bf16.mxu0 0
    %470 = vmatpush1.bf16.msra.mxu0 %v451
    %471 = vmatprep.subr.bf16.mxu0 0
    %472 = vmatpush1.bf16.msra.mxu0 %v450
    %473 = vmatprep.subr.bf16.mxu0 0
    %474 = vmatpush1.bf16.msra.mxu0 %v449
    %475 = vmatprep.subr.bf16.mxu0 0
    %476 = vmatpush1.bf16.msra.mxu0 %v448
    %477 = vmatprep.subr.bf16.mxu0 0
    %478 = vmatpush1.bf16.msra.mxu0 %v447
    %479 = vmatprep.subr.bf16.mxu0 0
    %480 = vmatpush2.bf16.msra.mxu0 0
    %481 = vmatprep.subr.bf16.mxu0 0
    %482 = vmatpush2.bf16.msra.mxu0 0
    %483 = vmatprep.subr.bf16.mxu0 0
    %484 = vmatpush2.bf16.msra.mxu0 0
    %485 = vmatprep.subr.bf16.mxu0 0
    %486 = vmatpush2.bf16.msra.mxu0 0
    %487 = vmatprep.subr.bf16.mxu0 0
    %488 = vmatpush2.bf16.msra.mxu0 0
    %489 = vmatprep.subr.bf16.mxu0 0
    %490 = vmatpush2.bf16.msra.mxu0 0
    %491 = vmatprep.subr.bf16.mxu0 0
    %492 = vmatpush2.bf16.msra.mxu0 0
    %493 = vmatprep.subr.bf16.mxu0 0
    %494 = vmatpush2.bf16.msra.mxu0 0
    %495 = vmatprep.mubr.bf16.mxu0 0
    %496 = vmatmul.mubr.bf16.gmra.mxu0 %v392
    %v497 = vpop.f32.mrf.mxu0
    %v498 = vadd.f32 %v414, %v497
    %v499 = vpop.f32.mrf.mxu0
    %v500 = vpop.f32.mrf.mxu0
    %v501 = vpop.f32.mrf.mxu0
    %502 = vdwg.mxu0
    %v503 = vtanh.pop %v498
    %504 = vst [vmem:[#allocation8] sm:$0xff] %v503
    // Predicated region
    $region30: #{tpu_custom_call.1} parent=1 // pred_check
      _
    $region31: #{tpu_custom_call.1} parent=1 // pred_check_branch
      %506 = sbr.rel (0) target = $region33
    $region32: #{tpu_custom_call.1} parent=1 // pred_region
      %s508 = ssub.s32 128, 128
      %509 = vsyncadd [#allocation4], %s508
      %s511 = sshll.u32 [#allocation8], 4
      %s512 = int_to_ptr.vmem [resolvable:$true] %s511
      %514 = dma.vmem_to_hbm [thread:$0]  %s512, 128, %s4, [#allocation4]
    $region33: #{tpu_custom_call.1} parent=1 // pred_fallthru
      _
    // Predicated region
    $region34: #{tpu_custom_call.1} parent=1 // pred_check
      _
    $region35: #{tpu_custom_call.1} parent=1 // pred_check_branch
      %516 = sbr.rel (0) target = $region37
    $region36: #{tpu_custom_call.1} parent=1 // pred_region
      %517 = dma.done [#allocation4], 128
    $region37: #{tpu_custom_call.1} parent=1 // pred_fallthru
      _
    %518 = vsyncpa [#allocation3], 1
    %519 = vsyncpa [#allocation6], 1
    %520 = vsyncpa [#allocation4], 1

</llo_original>
